<compile_context>
chip_gen: v7x
topology: tpu7x:2x2x1
jax: 0.10.0
libtpu: 0.0.40
codegen_flags: <defaults>
</compile_context>

<pallas_src>
import functools

import numpy as np
import jax
import jax.numpy as jnp
from jax.experimental import pallas as pl
from jax.experimental.pallas import tpu as pltpu

# Squeezed leading batch dim in BlockSpecs (falls back to None on older jax).
_SQ = pl.Squeezed() if hasattr(pl, "Squeezed") else None


def _feature_rebuild_kernel(fe_ref, fg_ref, feo_ref, acc_ref, *, C):
    """Grid (B, U//TU, F//TF); refs: fe (Cp,TF) f32, fg (TF,TU) int8, feo (Cp,TU) f32."""
    f = pl.program_id(2)

    @pl.when(f == 0)
    def _init():
        acc_ref[...] = jnp.zeros_like(acc_ref)

    # bf16 x bf16 on the MXU, f32 accumulation. fg values 0/1 and the ones row are exact
    # in bf16, so the occupancy counts stay exact; feature values pick up ~2^-9 rounding.
    fe_bf = fe_ref[...].astype(jnp.bfloat16)          # (Cp, TF)
    fg_bf = fg_ref[...].astype(jnp.bfloat16)          # (TF, TU)  int8 -> bf16 on VPU
    acc_ref[...] += jnp.dot(fe_bf, fg_bf, preferred_element_type=jnp.float32)

    @pl.when(f == pl.num_programs(2) - 1)
    def _finalize():
        acc = acc_ref[...]
        occ = acc[C:C + 1, :]                          # ones-row -> per-column occupancy
        inv = jnp.where(occ > 0.0, pl.reciprocal(occ, approx=True), 0.0)
        feo_ref[...] = acc * inv                       # padded columns stay exactly 0.0


def _vertex_and_queue_kernel(fe_ref, vs_ref, vgt_ref, sq_ref, vso_ref, *, C):
    """Grid (B,); U/F-independent work, executed exactly once per mesh."""
    fe = fe_ref[...]                                   # (Cp, F) f32
    feat = fe[:C, :]                                   # exclude ones/padding rows
    sq_ref[...] = jnp.sum(feat * feat, axis=0, keepdims=True)       # (1, F) f32, exact

    vs_bf = vs_ref[...].astype(jnp.bfloat16)           # (8, V) rows 0..2=xyz, 3=ones
    vgt_bf = vgt_ref[...].astype(jnp.bfloat16)         # (V, T) int8 -> bf16 (0/1/2 exact)
    vs_new = jnp.dot(vs_bf, vgt_bf, preferred_element_type=jnp.float32)   # (8, T)
    occ_v = vs_new[3:4, :]                             # ones-row -> vertex group sizes
    inv_v = jnp.where(occ_v > 0.0, pl.reciprocal(occ_v, approx=True), 0.0)
    vso_ref[...] = vs_new * inv_v


def mesh_unpool_learned(fe, vs, face_groups, vs_groups, *, tf_max=1024, tu_max=2048):
    """fe: (B,C,F) f32, vs: (B,V,3) f32, face_groups: (B,F,U), vs_groups: (B,T,V)."""
    B, C, F = fe.shape
    _, V, D = vs.shape
    assert D == 3
    U = face_groups.shape[-1]        # unroll_target
    T = vs_groups.shape[-2]          # vs_target
    Cp = ((C + 1 + 7) // 8) * 8      # features + ones row, padded to a sublane multiple

    # ---- tile selection (clamps to full extents at small sizes) ----
    TF = F if F <= tf_max else tf_max
    TU = U if U <= tu_max else tu_max
    assert F % TF == 0 and U % TU == 0, "F/U must divide the chosen tile sizes"
    NF, NU = F // TF, U // TU

    # ---- wrapper-side layout prep (tiny next to the F x U group matrix) ----
    parts = [fe.astype(jnp.float32), jnp.ones((B, 1, F), jnp.float32)]
    if Cp - C - 1 > 0:
        parts.append(jnp.zeros((B, Cp - C - 1, F), jnp.float32))
    fe_aug = jnp.concatenate(parts, axis=1)                            # (B, Cp, F) f32

    vs_t = jnp.transpose(vs.astype(jnp.float32), (0, 2, 1))            # (B, 3, V)
    vs_aug = jnp.concatenate(
        [vs_t, jnp.ones((B, 1, V), jnp.float32), jnp.zeros((B, 4, V), jnp.float32)],
        axis=1)                                                        # (B, 8, V) f32

    fg_i8 = face_groups.astype(jnp.int8)                               # (B, F, U) 0/1
    vgt_i8 = jnp.transpose(vs_groups, (0, 2, 1)).astype(jnp.int8)      # (B, V, T) 0/1/2

    # ---- VMEM budget for kernel A (2-deep pipeline + accumulator + cast temps) ----
    fe_tile = Cp * TF * 4
    fg_tile = TF * TU * 1
    feo_tile = Cp * TU * 4
    acc_tile = Cp * TU * 4
    cast_tmp = TF * TU * 2 + Cp * TF * 2
    need = 2 * (fe_tile + fg_tile + feo_tile) + acc_tile + cast_tmp + (2 << 20)
    vmem_limit = int(min(max(need, 16 << 20), 64 << 20))

    # ---- Kernel A: feature rebuild (dominant HBM stream) ----
    feo_aug = pl.pallas_call(
        functools.partial(_feature_rebuild_kernel, C=C),
        grid_spec=pltpu.PrefetchScalarGridSpec(
            num_scalar_prefetch=0,
            grid=(B, NU, NF),
            in_specs=[
                pl.BlockSpec((_SQ, Cp, TF), lambda b, u, f: (b, 0, f)),
                pl.BlockSpec((_SQ, TF, TU), lambda b, u, f: (b, f, u)),
            ],
            out_specs=pl.BlockSpec((_SQ, Cp, TU), lambda b, u, f: (b, 0, u)),
            scratch_shapes=[pltpu.VMEM((Cp, TU), jnp.float32)],
        ),
        out_shape=jax.ShapeDtypeStruct((B, Cp, U), jnp.float32),
        compiler_params=pltpu.CompilerParams(
            dimension_semantics=("parallel", "parallel", "arbitrary"),
            vmem_limit_bytes=vmem_limit),
    )(fe_aug, fg_i8)

    # ---- Kernel B: sqmag + vertex rebuild (once per mesh) ----
    sq, vso_t = pl.pallas_call(
        functools.partial(_vertex_and_queue_kernel, C=C),
        grid_spec=pltpu.PrefetchScalarGridSpec(
            num_scalar_prefetch=0,
            grid=(B,),
            in_specs=[
                pl.BlockSpec((_SQ, Cp, F), lambda b: (b, 0, 0)),
                pl.BlockSpec((_SQ, 8, V), lambda b: (b, 0, 0)),
                pl.BlockSpec((_SQ, V, T), lambda b: (b, 0, 0)),
            ],
            out_specs=[
                pl.BlockSpec((_SQ, 1, F), lambda b: (b, 0, 0)),
                pl.BlockSpec((_SQ, 8, T), lambda b: (b, 0, 0)),
            ],
        ),
        out_shape=(
            jax.ShapeDtypeStruct((B, 1, F), jnp.float32),
            jax.ShapeDtypeStruct((B, 8, T), jnp.float32),
        ),
        compiler_params=pltpu.CompilerParams(
            dimension_semantics=("parallel",)),
    )(fe_aug, vs_aug, vgt_i8)

    out_features = feo_aug[:, :C, :]                           # (B, C, U)
    out_vs = jnp.transpose(vso_t[:, :3, :], (0, 2, 1))         # (B, T, 3)
    sqmag = sq[:, 0, :]                                        # (B, F)
    # (out_features, out_vs, meshes) in the original module; meshes are host objects.
    return out_features, out_vs, sqmag


def build_group_matrices(B, F, U, V, T):
    """Deterministic synthetic MeshUnion group matrices standing in for the host-side
    heap-driven face-subdivision result (see TODO at top)."""
    n_new_faces = F + 48          # faces after splitting (<= unroll_target U)
    n_new_vs = V + 32             # vertices after splitting (<= vs_target T)
    fgroups = np.zeros((B, F, U), dtype=np.float32)
    vgroups = np.zeros((B, T, V), dtype=np.float32)
    for b in range(B):
        fgroups[b, np.arange(F), np.arange(F)] = 1.0
        for j in range(F, n_new_faces):
            src = (j * 7 + b) % F
            fgroups[b, src, j] = 1.0
        vgroups[b, np.arange(V), np.arange(V)] = 1.0
        for i in range(V, n_new_vs):
            p1 = (i * 3 + b) % V
            p2 = (i * 5 + 1 + b) % V
            if p2 == p1:
                p2 = (p2 + 1) % V
            vgroups[b, i, p1] += 1.0
            vgroups[b, i, p2] += 1.0
    return jnp.asarray(fgroups), jnp.asarray(vgroups)


def _reference(fe, vs, fgroups, vgroups):
    sqmag = jnp.sum(fe * fe, axis=1)
    fe_new = jnp.einsum("bcf,bfu->bcu", fe, fgroups)
    occ_f = jnp.sum(fgroups, axis=1, keepdims=True)
    fe_new = jnp.where(occ_f > 0, fe_new / occ_f, 0.0)
    vs_new = jnp.einsum("btv,bvd->btd", vgroups, vs)
    occ_v = jnp.sum(vgroups, axis=2, keepdims=True)
    vs_new = jnp.where(occ_v > 0, vs_new / occ_v, 0.0)
    return fe_new, vs_new, sqmag


if __name__ == "__main__":
    B, C, F = 2, 8, 128          # batch (num meshes), channels, initial faces
    V = 64                       # initial vertices per mesh
    UNROLL_TARGET = 256          # self.unroll_target
    VS_TARGET = 128              # self.vs_target

    key = jax.random.PRNGKey(0)
    k1, k2 = jax.random.split(key)
    fe = jax.random.normal(k1, (B, C, F), dtype=jnp.float32)
    vs = jax.random.normal(k2, (B, V, 3), dtype=jnp.float32)
    face_groups, vs_groups = build_group_matrices(B, F, UNROLL_TARGET, V, VS_TARGET)

    out_features, out_vs, sqmag = mesh_unpool_learned(fe, vs, face_groups, vs_groups)
    jax.block_until_ready((out_features, out_vs, sqmag))

    ref_fe, ref_vs, ref_sq = _reference(fe, vs, face_groups, vs_groups)
    # Feature / vertex outputs use bf16 MXU operands (~2^-9 rounding) + the EUP approx
    # reciprocal (~2^-12), so allow ~1e-2-level slack; padded zeros stay bit-exact by
    # construction. sqmag is computed fully in f32 -> tight tolerance.
    np.testing.assert_allclose(np.asarray(out_features), np.asarray(ref_fe),
                               rtol=2e-2, atol=2e-2)
    np.testing.assert_allclose(np.asarray(out_vs), np.asarray(ref_vs),
                               rtol=2e-2, atol=2e-2)
    np.testing.assert_allclose(np.asarray(sqmag), np.asarray(ref_sq),
                               rtol=1e-5, atol=1e-5)

    assert out_features.shape == (B, C, UNROLL_TARGET)
    assert out_vs.shape == (B, VS_TARGET, 3)
    assert sqmag.shape == (B, F)
    print("KERNEL_OK")
</pallas_src>

<mosaic_0001>
module attributes {stable_mosaic.version = 11 : i64} {
  func.func @_feature_rebuild_kernel(%arg0: i32, %arg1: i32, %arg2: i32, %arg3: memref<1x16x128xf32, #tpu.memory_space<vmem>>, %arg4: memref<1x128x256xi8, #tpu.memory_space<vmem>>, %arg5: memref<1x16x256xf32, #tpu.memory_space<vmem>>, %arg6: memref<16x256xf32, #tpu.memory_space<vmem>>) attributes {dimension_semantics = [#tpu.dimension_semantics<parallel>, #tpu.dimension_semantics<parallel>, #tpu.dimension_semantics<arbitrary>], iteration_bounds = array<i64: 2, 1, 1>, scalar_prefetch = 0 : i64, scratch_operands = 1 : i64, tpu.core_type = #tpu.core_type<tc>, window_params = [{transform_indices = @transform_0, window_bounds = array<i64: 1, 16, 128>}, {transform_indices = @transform_1, window_bounds = array<i64: 1, 128, 256>}, {transform_indices = @transform_2, window_bounds = array<i64: 1, 16, 256>}]} {
    %c0_i32 = arith.constant 0 : i32
    %0 = arith.cmpi eq, %arg2, %c0_i32 : i32
    %1 = arith.extui %0 : i1 to i32
    %c0_i32_0 = arith.constant 0 : i32
    %2 = arith.cmpi ne, %1, %c0_i32_0 : i32
    scf.if %2 {
      %cst_12 = arith.constant 0.000000e+00 : f32
      %16 = vector.broadcast %cst_12 : f32 to vector<16x256xf32>
      %c0_13 = arith.constant 0 : index
      %c0_14 = arith.constant 0 : index
      %17 = vector.load %arg6[%c0_13, %c0_14] : memref<16x256xf32, #tpu.memory_space<vmem>>, vector<16x256xf32>
      tpu.vector_store %arg6[%c0_13, %c0_14], %16 {strides = array<i32>} : memref<16x256xf32, #tpu.memory_space<vmem>>, vector<16x256xf32>,
    } else {
    }
    %c0 = arith.constant 0 : index
    %c0_1 = arith.constant 0 : index
    %c0_2 = arith.constant 0 : index
    %3 = vector.load %arg3[%c0, %c0_1, %c0_2] : memref<1x16x128xf32, #tpu.memory_space<vmem>>, vector<1x16x128xf32>
    %4 = vector.shape_cast %3 : vector<1x16x128xf32> to vector<16x128xf32>
    %5 = arith.truncf %4 : vector<16x128xf32> to vector<16x128xbf16>
    %c0_3 = arith.constant 0 : index
    %c0_4 = arith.constant 0 : index
    %c0_5 = arith.constant 0 : index
    %6 = vector.load %arg4[%c0_3, %c0_4, %c0_5] : memref<1x128x256xi8, #tpu.memory_space<vmem>>, vector<1x128x256xi8>
    %7 = vector.shape_cast %6 : vector<1x128x256xi8> to vector<128x256xi8>
    %8 = arith.sitofp %7 : vector<128x256xi8> to vector<128x256xbf16>
    %c0_6 = arith.constant 0 : index
    %c0_7 = arith.constant 0 : index
    %9 = vector.load %arg6[%c0_6, %c0_7] : memref<16x256xf32, #tpu.memory_space<vmem>>, vector<16x256xf32>
    %cst = arith.constant dense<0.000000e+00> : vector<16x256xf32>
    %10 = tpu.matmul %5, %8, %cst {dimension_numbers = #tpu.dot_dimension_numbers<[1], [0], [0], [1], [0, 0, 1, 1], [], []>} : vector<16x128xbf16>, vector<128x256xbf16>, vector<16x256xf32> -> vector<16x256xf32>
    %11 = arith.addf %9, %10 : vector<16x256xf32>
    %c0_8 = arith.constant 0 : index
    %c0_9 = arith.constant 0 : index
    %12 = vector.load %arg6[%c0_8, %c0_9] : memref<16x256xf32, #tpu.memory_space<vmem>>, vector<16x256xf32>
    tpu.vector_store %arg6[%c0_8, %c0_9], %11 {strides = array<i32>} : memref<16x256xf32, #tpu.memory_space<vmem>>, vector<16x256xf32>,
    %c0_i32_10 = arith.constant 0 : i32
    %13 = arith.cmpi eq, %arg2, %c0_i32_10 : i32
    %14 = arith.extui %13 : i1 to i32
    %c0_i32_11 = arith.constant 0 : i32
    %15 = arith.cmpi ne, %14, %c0_i32_11 : i32
    scf.if %15 {
      %c0_12 = arith.constant 0 : index
      %c0_13 = arith.constant 0 : index
      %16 = vector.load %arg6[%c0_12, %c0_13] : memref<16x256xf32, #tpu.memory_space<vmem>>, vector<16x256xf32>
      %17 = vector.extract_strided_slice %16 {offsets = [8, 0], sizes = [1, 256], strides = [1, 1]} : vector<16x256xf32> to vector<1x256xf32>
      %cst_14 = arith.constant 0.000000e+00 : f32
      %18 = vector.broadcast %cst_14 : f32 to vector<1x256xf32>
      %19 = arith.cmpf ogt, %17, %18 : vector<1x256xf32>
      %20 = tpu.reciprocal %17 {approx = true} : vector<1x256xf32> -> vector<1x256xf32>
      %cst_15 = arith.constant 0.000000e+00 : f32
      %21 = vector.broadcast %cst_15 : f32 to vector<1x256xf32>
      %22 = arith.select %19, %20, %21 : vector<1x256xi1>, vector<1x256xf32>
      %23 = vector.broadcast %22 : vector<1x256xf32> to vector<16x256xf32>
      %24 = arith.mulf %16, %23 : vector<16x256xf32>
      %c0_16 = arith.constant 0 : index
      %c0_17 = arith.constant 0 : index
      %c0_18 = arith.constant 0 : index
      %25 = vector.load %arg5[%c0_16, %c0_17, %c0_18] : memref<1x16x256xf32, #tpu.memory_space<vmem>>, vector<1x16x256xf32>
      %26 = vector.shape_cast %25 : vector<1x16x256xf32> to vector<16x256xf32>
      %27 = vector.shape_cast %24 : vector<16x256xf32> to vector<1x16x256xf32>
      tpu.vector_store %arg5[%c0_16, %c0_17, %c0_18], %27 {strides = array<i32>} : memref<1x16x256xf32, #tpu.memory_space<vmem>>, vector<1x16x256xf32>,
    } else {
    }
    return
  }
  func.func @transform_0(%arg0: i32, %arg1: i32, %arg2: i32) -> (i32, i32, i32) {
    %c0_i32 = arith.constant 0 : i32
    %c0_i32_0 = arith.constant 0 : i32
    return %arg0, %c0_i32, %arg2 : i32, i32, i32
  }
  func.func @transform_1(%arg0: i32, %arg1: i32, %arg2: i32) -> (i32, i32, i32) {
    %c0_i32 = arith.constant 0 : i32
    return %arg0, %arg2, %arg1 : i32, i32, i32
  }
  func.func @transform_2(%arg0: i32, %arg1: i32, %arg2: i32) -> (i32, i32, i32) {
    %c0_i32 = arith.constant 0 : i32
    %c0_i32_0 = arith.constant 0 : i32
    return %arg0, %c0_i32, %arg1 : i32, i32, i32
  }
}

</mosaic_0001>

<llo_original>
// kernel: tpu_custom_call.1
$region0: #{tpu_custom_call.1}
  #allocation0 [shape = 'u32[]', space=smem, size = 0x4, offset = 0x4, fixed_abs, tag = 'smem constant byte address 0x4 - core index']
  #allocation1 [shape = 'u32[144,128]{1,0:T(1,128)}', space=vmem, size = 0x12000, scoped, tag = 'internal scratch']
  #allocation2 [shape = 'f32[16,256]{1,0:T(8,128)}', space=vmem, size = 0x4000, scoped, tag = 'scratch operand']
  %s0 = inlined_call_operand.hbm [shape: f32[2,16,128], index: 0, kind: input, shape index: {}]
  %s1 = inlined_call_operand.hbm [shape: s8[2,128,256], index: 1, kind: input, shape index: {}]
  %s2 = inlined_call_operand.hbm [shape: f32[2,16,256], index: 2, kind: output, shape index: {}]
  %s3 = sld [smem:[#allocation0]]
  $region57: #{tpu_custom_call.1} parent=0
    _
  %s5 = ssub.s32 1, %s3
  %s6 = scalar_select 0, %s5, %s3
  $region1: #{tpu_custom_call.1} parent=0
    #allocation3 [shape = 'u8[16384]{0}', space=vmem, size = 0x4000, scoped, tag = 'input window, operand 0']
    #allocation4 [shape = 's32[2]{0}', space=sflag, size = 0x8, scoped, tag = 'scoped memory for tpu_custom_call.1']
    #allocation5 [shape = 's32[2]{0}', space=sflag, size = 0x8, scoped, tag = 'scoped memory for tpu_custom_call.1']
    #allocation6 [shape = 'u8[65536]{0}', space=vmem, size = 0x10000, scoped, tag = 'input window, operand 1']
    #allocation7 [shape = 's32[2]{0}', space=sflag, size = 0x8, scoped, tag = 'scoped memory for tpu_custom_call.1']
    #allocation8 [shape = 'u8[32768]{0}', space=vmem, size = 0x8000, scoped, tag = 'output window, operand 0']
    %7 = vsyncpa [#allocation4], 0
    %s8 = scalar_lea.sflag [#allocation4], 1
    %9 = vsyncpa %s8, 0
    %10 = vsyncpa [#allocation7], 0
    %s11 = scalar_lea.sflag [#allocation7], 1
    %12 = vsyncpa %s11, 0
    %13 = vsyncpa [#allocation5], 0
    %s14 = scalar_lea.sflag [#allocation5], 1
    %15 = vsyncpa %s14, 0
    loop: start=0, step=1, limit=4
    $region2: #{tpu_custom_call.1} parent=1 // loop_pre_header
      _
    $region3: #{tpu_custom_call.1} parent=1 // loop_header
      %s17 = sphi 0, %s21
      %p18 = scmp.ge.s32.totalorder %s17, 4
      %s24 = sphi 0, %s43
      %s25 = sphi 0, %s39
      %s26 = sphi 0, %s35
      %s27 = sphi 0, %s24
      %s28 = sphi 0, %s25
      %s29 = sphi 0, %s26
      %s30 = sphi 0, %s27
      %s31 = sphi 0, %s28
      %s32 = sphi 0, %s29
      %s48 = sphi 0, %s50
      %s51 = sphi 0, %s48
      %s52 = sphi 0, %s51
      %s68 = sphi 0, %s52
      %s78 = sphi 0, %s80
      %s81 = sphi 0, %s78
      %s82 = sphi 0, %s81
      %s98 = sphi 0, %s82
      %s106 = sphi 0, %s108
      %s109 = sphi 0, %s106
      %s110 = sphi 0, %s109
      %s126 = sphi 0, %s110
    $region4: #{tpu_custom_call.1} parent=1 // loop_header_branch
      %20 = sbr.rel (%p18) target = $region8
    $region5: #{tpu_custom_call.1} parent=1 // loop_body
      %s22 = ssub.s32 %s17, 1
      %s23 = ssub.s32 %s17, 2
      %s33 = sadd.s32 1, %s26
      %p34 = scmp.ge.s32.totalorder %s33, 1
      %s35 = scalar_select %p34, 0, %s33
      %s36 = sadd.s32 1, %s25
      %s37 = scalar_select %p34, %s36, %s25
      %p38 = scmp.ge.s32.totalorder %s37, 1
      %s39 = scalar_select %p38, 0, %s37
      %s40 = sadd.s32 1, %s24
      %s41 = scalar_select %p38, %s40, %s24
      %p42 = scmp.ge.s32.totalorder %s41, 2
      %s43 = scalar_select %p42, 0, %s41
      %s44 = ssub.s32 %s24, %s43
      %s45 = ssub.s32 %s26, %s35
      %s46 = sor.u32 %s44, %s45
      %p47 = scmp.eq.s32.totalorder %s46, 0
      %s49 = sadd.s32 %s48, 1
      %s50 = scalar_select %p47, %s48, %s49
      %p53 = pneg %p47
      %p54 = scmp.eq.s32.totalorder %s17, 1
      %p55 = por %p53, %p54
      %p56 = scmp.ne.s32.totalorder %s48, %s51
      %p57 = scmp.eq.s32.totalorder %s17, 0
      %p58 = por %p56, %p57
      %p59 = scmp.ne.s32.totalorder %s48, %s51
      %p60 = scmp.eq.s32.totalorder %s22, 1
      %p61 = por %p59, %p60
      %p62 = scmp.ne.s32.totalorder %s51, %s52
      %p63 = scmp.eq.s32.totalorder %s22, 0
      %p64 = por %p62, %p63
      %p65 = scmp.ne.s32.totalorder %s51, %s52
      %p66 = scmp.eq.s32.totalorder %s23, 1
      %p67 = por %p65, %p66
      %p69 = scmp.ne.s32.totalorder %s52, %s68
      %p70 = scmp.eq.s32.totalorder %s23, 0
      %p71 = por %p69, %p70
      %s72 = ssub.s32 %s24, %s43
      %s73 = ssub.s32 %s26, %s35
      %s74 = sor.u32 %s72, %s73
      %s75 = ssub.s32 %s25, %s39
      %s76 = sor.u32 %s74, %s75
      %p77 = scmp.eq.s32.totalorder %s76, 0
      %s79 = sadd.s32 %s78, 1
      %s80 = scalar_select %p77, %s78, %s79
      %p83 = pneg %p77
      %p84 = scmp.eq.s32.totalorder %s17, 1
      %p85 = por %p83, %p84
      %p86 = scmp.ne.s32.totalorder %s78, %s81
      %p87 = scmp.eq.s32.totalorder %s17, 0
      %p88 = por %p86, %p87
      %p89 = scmp.ne.s32.totalorder %s78, %s81
      %p90 = scmp.eq.s32.totalorder %s22, 1
      %p91 = por %p89, %p90
      %p92 = scmp.ne.s32.totalorder %s81, %s82
      %p93 = scmp.eq.s32.totalorder %s22, 0
      %p94 = por %p92, %p93
      %p95 = scmp.ne.s32.totalorder %s81, %s82
      %p96 = scmp.eq.s32.totalorder %s23, 1
      %p97 = por %p95, %p96
      %p99 = scmp.ne.s32.totalorder %s82, %s98
      %p100 = scmp.eq.s32.totalorder %s23, 0
      %p101 = por %p99, %p100
      %s102 = ssub.s32 %s24, %s43
      %s103 = ssub.s32 %s25, %s39
      %s104 = sor.u32 %s102, %s103
      %p105 = scmp.eq.s32.totalorder %s104, 0
      %s107 = sadd.s32 %s106, 1
      %s108 = scalar_select %p105, %s106, %s107
      %p111 = pneg %p105
      %p112 = scmp.eq.s32.totalorder %s17, 1
      %p113 = por %p111, %p112
      %p114 = scmp.ne.s32.totalorder %s106, %s109
      %p115 = scmp.eq.s32.totalorder %s17, 0
      %p116 = por %p114, %p115
      %p117 = scmp.ne.s32.totalorder %s106, %s109
      %p118 = scmp.eq.s32.totalorder %s22, 1
      %p119 = por %p117, %p118
      %p120 = scmp.ne.s32.totalorder %s109, %s110
      %p121 = scmp.eq.s32.totalorder %s22, 0
      %p122 = por %p120, %p121
      %p123 = scmp.ne.s32.totalorder %s109, %s110
      %p124 = scmp.eq.s32.totalorder %s23, 1
      %p125 = por %p123, %p124
      %p127 = scmp.ne.s32.totalorder %s110, %s126
      %p128 = scmp.eq.s32.totalorder %s23, 0
      %p129 = por %p127, %p128
      %p130 = scmp.le.s32.totalorder 1, %s17
      %p131 = scmp.lt.s32.totalorder %s17, 3
      %p132 = pnand %p130, %p131
      %p133 = pneg %p132
      // Predicated region
      $region9: #{tpu_custom_call.1} parent=5 // pred_check
        _
      $region10: #{tpu_custom_call.1} parent=5 // pred_check_branch
        %135 = sbr.rel (%p132) target = $region12
      $region11: #{tpu_custom_call.1} parent=5 // pred_region
        %s136 = ssub.s32 %s17, 1
      $region12: #{tpu_custom_call.1} parent=5 // pred_fallthru
        _
      %p137 = scmp.lt.s32.totalorder %s17, 2
      // Predicated region
      $region13: #{tpu_custom_call.1} parent=5 // pred_check
        %p138 = pneg %p137
      $region14: #{tpu_custom_call.1} parent=5 // pred_check_branch
        %140 = sbr.rel (%p138) target = $region16
      $region15: #{tpu_custom_call.1} parent=5 // pred_region
        // Predicated region
        $region17: #{tpu_custom_call.1} parent=15 // pred_check
          %p141 = pneg %p58
        $region18: #{tpu_custom_call.1} parent=15 // pred_check_branch
          %143 = sbr.rel (%p141) target = $region20
        $region19: #{tpu_custom_call.1} parent=15 // pred_region
          %s144 = sand.u32 %s48, 1
          %s145 = scalar_lea.sflag [#allocation4], %s144
          %s146 = sand.u32 %s48, 1
          %s147 = smul.addr %s146, 16
          %s148 = scalar_lea.vmem [#allocation3], %s147
          %s150 = ssub.s32 256, 256
          %151 = vsyncadd %s145, %s150
          %s152 = smul.addr %s24, 2
          %s153 = sadd.s32 %s26, %s152
          %s154 = smul.addr %s153, 128
          %s155 = scalar_lea.hbm %s0, %s154
          %s156 = sshll.u32 %s148, 4
          %s157 = int_to_ptr.vmem [resolvable:$true] %s156
          %162 = dma.hbm_to_vmem [thread:$0]  %s155, 256, %s157, %s145, 128, 128, 8
        $region20: #{tpu_custom_call.1} parent=15 // pred_fallthru
          _
        // Predicated region
        $region21: #{tpu_custom_call.1} parent=15 // pred_check
          %p163 = pneg %p88
        $region22: #{tpu_custom_call.1} parent=15 // pred_check_branch
          %165 = sbr.rel (%p163) target = $region24
        $region23: #{tpu_custom_call.1} parent=15 // pred_region
          %s166 = sand.u32 %s78, 1
          %s167 = scalar_lea.sflag [#allocation7], %s166
          %s168 = sand.u32 %s78, 1
          %s169 = smul.addr %s168, 64
          %s170 = scalar_lea.vmem [#allocation6], %s169
          %s171 = smul.u32 4, %s26
          %s172 = smul.u32 2, %s25
          %s174 = ssub.s32 1024, 1024
          %175 = vsyncadd %s167, %s174
          %s176 = smul.addr %s171, 2
          %s177 = sadd.s32 %s172, %s176
          %s178 = smul.addr %s24, 8
          %s179 = sadd.s32 %s177, %s178
          %s180 = smul.addr %s179, 128
          %s181 = scalar_lea.hbm %s1, %s180
          %s182 = sshll.u32 %s170, 4
          %s183 = int_to_ptr.vmem [resolvable:$true] %s182
          %188 = dma.hbm_to_vmem [thread:$0]  %s181, 1024, %s183, %s167, 256, 256, 16
        $region24: #{tpu_custom_call.1} parent=15 // pred_fallthru
          _
      $region16: #{tpu_custom_call.1} parent=5 // pred_fallthru
        _
      %p189 = scmp.le.s32.totalorder 1, %s17
      %p190 = scmp.lt.s32.totalorder %s17, 3
      %p191 = pnand %p189, %p190
      %p192 = pneg %p191
      // Predicated region
      $region25: #{tpu_custom_call.1} parent=5 // pred_check
        _
      $region26: #{tpu_custom_call.1} parent=5 // pred_check_branch
        %194 = sbr.rel (%p191) target = $region28
      $region27: #{tpu_custom_call.1} parent=5 // pred_region
        %s195 = ssub.s32 %s17, 1
        %s196 = sand.u32 %s51, 1
        %s197 = scalar_lea.sflag [#allocation4], %s196
        %s198 = sand.u32 %s51, 1
        %s199 = smul.addr %s198, 16
        %s200 = scalar_lea.vmem [#allocation3], %s199
        // Predicated region
        $region29: #{tpu_custom_call.1} parent=27 // pred_check
          %p201 = pneg %p64
        $region30: #{tpu_custom_call.1} parent=27 // pred_check_branch
          %203 = sbr.rel (%p201) target = $region32
        $region31: #{tpu_custom_call.1} parent=27 // pred_region
          %204 = dma.done %s197, 256
        $region32: #{tpu_custom_call.1} parent=27 // pred_fallthru
          _
        %s205 = sand.u32 %s81, 1
        %s206 = scalar_lea.sflag [#allocation7], %s205
        %s207 = sand.u32 %s81, 1
        %s208 = smul.addr %s207, 64
        %s209 = scalar_lea.vmem [#allocation6], %s208
        // Predicated region
        $region33: #{tpu_custom_call.1} parent=27 // pred_check
          %p210 = pneg %p94
        $region34: #{tpu_custom_call.1} parent=27 // pred_check_branch
          %212 = sbr.rel (%p210) target = $region36
        $region35: #{tpu_custom_call.1} parent=27 // pred_region
          %213 = dma.done %s206, 1024
        $region36: #{tpu_custom_call.1} parent=27 // pred_fallthru
          _
        %s214 = sand.u32 %s51, 1
        %s215 = scalar_lea.sflag [#allocation4], %s214
        %s216 = sand.u32 %s51, 1
        %s217 = smul.addr %s216, 16
        %s218 = scalar_lea.vmem [#allocation3], %s217
        %p219 = pneg %p64
        %p220 = pneg %p61
        %s221 = sand.u32 %s81, 1
        %s222 = scalar_lea.sflag [#allocation7], %s221
        %s223 = sand.u32 %s81, 1
        %s224 = smul.addr %s223, 64
        %s225 = scalar_lea.vmem [#allocation6], %s224
        %p226 = pneg %p94
        %p227 = pneg %p91
        %p228 = pneg %p122
        %p229 = pneg %p119
        %s230 = sand.u32 %s109, 1
        %s231 = scalar_lea.sflag [#allocation5], %s230
        %s232 = sand.u32 %s109, 1
        %s233 = smul.addr %s232, 32
        %s234 = scalar_lea.vmem [#allocation8], %s233
        %s235 = smul.u32 4, %s29
        %s236 = smul.u32 2, %s28
        %s237 = smul.u32 2, %s28
        %p239 = scmp.eq.s32.totalorder %s29, 0
        // Predicated region
        $region37: #{tpu_custom_call.1} parent=27 // pred_check
          %p240 = pneg %p239
        $region38: #{tpu_custom_call.1} parent=27 // pred_check_branch
          %242 = sbr.rel (%p240) target = $region40
        $region39: #{tpu_custom_call.1} parent=27 // pred_region
          %243 = vst [vmem:[#allocation2] sm:$0xff] 0.0
          %244 = vst [vmem:[#allocation2 + $0x8] sm:$0xff] 0.0
          %245 = vst [vmem:[#allocation2 + $0x10] sm:$0xff] 0.0
          %246 = vst [vmem:[#allocation2 + $0x18] sm:$0xff] 0.0
        $region40: #{tpu_custom_call.1} parent=27 // pred_fallthru
          _
        %v247 = vld [vmem:[%s200] sm:$0xff]
        %v248 = vld [vmem:[%s200 + $0x8] sm:$0xff]
        %v249 = vpack.c.bf16 %v248, %v247
        %v250 = vld [vmem:[%s209] sm:$0xff]
        %v251 = vld [vmem:[%s209 + $0x8] sm:$0xff]
        %v252 = vld [vmem:[%s209 + $0x10] sm:$0xff]
        %v253 = vld [vmem:[%s209 + $0x18] sm:$0xff]
        %v254 = vld [vmem:[%s209 + $0x20] sm:$0xff]
        %v255 = vld [vmem:[%s209 + $0x28] sm:$0xff]
        %v256 = vld [vmem:[%s209 + $0x30] sm:$0xff]
        %v257 = vld [vmem:[%s209 + $0x38] sm:$0xff]
        %v258 = vunpack.c.l.s8.bf16 %v250
        %v259 = vunpack.c.l.s8.bf16 %v251
        %v260 = vunpack.c.h.s8.bf16 %v250
        %v261 = vunpack.c.h.s8.bf16 %v251
        %v262 = vunpack.c.l.s8.bf16 %v252
        %v263 = vunpack.c.l.s8.bf16 %v253
        %v264 = vunpack.c.h.s8.bf16 %v252
        %v265 = vunpack.c.h.s8.bf16 %v253
        %v266 = vunpack.c.l.s8.bf16 %v254
        %v267 = vunpack.c.l.s8.bf16 %v255
        %v268 = vunpack.c.h.s8.bf16 %v254
        %v269 = vunpack.c.h.s8.bf16 %v255
        %v270 = vunpack.c.l.s8.bf16 %v256
        %v271 = vunpack.c.l.s8.bf16 %v257
        %v272 = vunpack.c.h.s8.bf16 %v256
        %v273 = vunpack.c.h.s8.bf16 %v257
        %v274 = vld [vmem:[#allocation2] sm:$0xff]
        %v275 = vld [vmem:[#allocation2 + $0x8] sm:$0xff]
        %v276 = vld [vmem:[#allocation2 + $0x10] sm:$0xff]
        %v277 = vld [vmem:[#allocation2 + $0x18] sm:$0xff]
        %278 = vmatprep.subr.bf16.mxu0 %v259
        %279 = vmatpush1.bf16.msra.mxu0 %v258
        %280 = vmatprep.subr.bf16.mxu0 %v261
        %281 = vmatpush1.bf16.msra.mxu0 %v260
        %282 = vmatprep.subr.bf16.mxu0 %v263
        %283 = vmatpush1.bf16.msra.mxu0 %v262
        %284 = vmatprep.subr.bf16.mxu0 %v265
        %285 = vmatpush1.bf16.msra.mxu0 %v264
        %286 = vmatprep.subr.bf16.mxu0 %v267
        %287 = vmatpush1.bf16.msra.mxu0 %v266
        %288 = vmatprep.subr.bf16.mxu0 %v269
        %289 = vmatpush1.bf16.msra.mxu0 %v268
        %290 = vmatprep.subr.bf16.mxu0 %v271
        %291 = vmatpush1.bf16.msra.mxu0 %v270
        %292 = vmatprep.subr.bf16.mxu0 %v273
        %293 = vmatpush1.bf16.msra.mxu0 %v272
        %294 = vmatprep.subr.bf16.mxu0 0
        %295 = vmatpush1.bf16.msra.mxu0 0
        %296 = vmatprep.subr.bf16.mxu0 0
        %297 = vmatpush1.bf16.msra.mxu0 0
        %298 = vmatprep.subr.bf16.mxu0 0
        %299 = vmatpush1.bf16.msra.mxu0 0
        %300 = vmatprep.subr.bf16.mxu0 0
        %301 = vmatpush1.bf16.msra.mxu0 0
        %302 = vmatprep.subr.bf16.mxu0 0
        %303 = vmatpush1.bf16.msra.mxu0 0
        %304 = vmatprep.subr.bf16.mxu0 0
        %305 = vmatpush1.bf16.msra.mxu0 0
        %306 = vmatprep.subr.bf16.mxu0 0
        %307 = vmatpush1.bf16.msra.mxu0 0
        %308 = vmatprep.subr.bf16.mxu0 0
        %309 = vmatpush1.bf16.msra.mxu0 0
        %310 = vmatprep.mubr.bf16.mxu0 0
        %311 = vmatmul.mubr.bf16.gmra.mrb[0].mxu0 %v249
        %v312 = vpop.f32.mrb[0].mxu0
        %v313 = vadd.f32 0.0, %v312
        %v314 = vpop.f32.mrb[0].mxu0
        %v315 = vadd.f32 0.0, %v314
        %v316 = vpop.f32.mrb[0].mxu0
        %v317 = vadd.f32 0.0, %v316
        %v318 = vpop.f32.mrb[0].mxu0
        %v319 = vadd.f32 0.0, %v318
        %320 = vdwg.mxu0
        %v321 = vadd.f32 %v274, %v313
        %v322 = vadd.f32 %v275, %v315
        %v323 = vadd.f32 %v276, %v317
        %v324 = vadd.f32 %v277, %v319
        %325 = vst [vmem:[#allocation2] sm:$0xff] %v321
        %326 = vst [vmem:[#allocation2 + $0x8] sm:$0xff] %v322
        %327 = vst [vmem:[#allocation2 + $0x10] sm:$0xff] %v323
        %328 = vst [vmem:[#allocation2 + $0x18] sm:$0xff] %v324
        // Predicated region
        $region41: #{tpu_custom_call.1} parent=27 // pred_check
          %p329 = pneg %p239
        $region42: #{tpu_custom_call.1} parent=27 // pred_check_branch
          %331 = sbr.rel (%p329) target = $region44
        $region43: #{tpu_custom_call.1} parent=27 // pred_region
          %v332 = vld [vmem:[#allocation2] sm:$0xff]
          %v333 = vld [vmem:[#allocation2 + $0x8] sm:$0xff]
          %v334 = vld [vmem:[#allocation2 + $0x10] sm:$0xff]
          %v335 = vld [vmem:[#allocation2 + $0x18] sm:$0xff]
          %vm336 = vcmp.gt.f32.partialorder %v334, 0.0
          %vm337 = vcmp.gt.f32.partialorder %v335, 0.0
          %v338 = vrcp.pop %v334
          %v339 = vrcp.pop %v335
          %v340 = vsel %vm336, %v338, 0.0
          %v341 = vsel %vm337, %v339, 0.0
          %v342 = vlaneseq
          %v343 = vshrl.u32 %v342, 7
          %v344 = vsub.s32 0, %v343
          %v345 = vrot.slane %v340, %v344
          %v346 = vlaneseq
          %v347 = vshrl.u32 %v346, 7
          %v348 = vsub.s32 0, %v347
          %v349 = vrot.slane %v341, %v348
          %v350 = vmul.f32 %v332, %v345
          %v351 = vmul.f32 %v333, %v349
          %v352 = vmul.f32 %v334, %v345
          %v353 = vmul.f32 %v335, %v349
          %354 = vst [vmem:[%s234] sm:$0xff] %v350
          %355 = vst [vmem:[%s234 + $0x8] sm:$0xff] %v351
          %356 = vst [vmem:[%s234 + $0x10] sm:$0xff] %v352
          %357 = vst [vmem:[%s234 + $0x18] sm:$0xff] %v353
        $region44: #{tpu_custom_call.1} parent=27 // pred_fallthru
          _
        %s358 = sand.u32 %s109, 1
        %s359 = scalar_lea.sflag [#allocation5], %s358
        %s360 = sand.u32 %s109, 1
        %s361 = smul.addr %s360, 32
        %s362 = scalar_lea.vmem [#allocation8], %s361
        // Predicated region
        $region45: #{tpu_custom_call.1} parent=27 // pred_check
          %p363 = pneg %p119
        $region46: #{tpu_custom_call.1} parent=27 // pred_check_branch
          %365 = sbr.rel (%p363) target = $region48
        $region47: #{tpu_custom_call.1} parent=27 // pred_region
          %s366 = smul.u32 2, %s28
          %s368 = ssub.s32 512, 512
          %369 = vsyncadd %s359, %s368
          %s370 = smul.addr %s27, 4
          %s371 = sadd.s32 %s366, %s370
          %s372 = smul.addr %s371, 128
          %s373 = scalar_lea.hbm %s2, %s372
          %s374 = sshll.u32 %s362, 4
          %s375 = int_to_ptr.vmem [resolvable:$true] %s374
          %380 = dma.vmem_to_hbm [thread:$0]  %s375, 512, %s373, %s359, 256, 256, 16
        $region48: #{tpu_custom_call.1} parent=27 // pred_fallthru
          _
      $region28: #{tpu_custom_call.1} parent=5 // pred_fallthru
        _
      %p381 = scmp.le.s32.totalorder 2, %s17
      // Predicated region
      $region49: #{tpu_custom_call.1} parent=5 // pred_check
        %p382 = pneg %p381
      $region50: #{tpu_custom_call.1} parent=5 // pred_check_branch
        %384 = sbr.rel (%p382) target = $region52
      $region51: #{tpu_custom_call.1} parent=5 // pred_region
        %s385 = ssub.s32 %s17, 2
        // Predicated region
        $region53: #{tpu_custom_call.1} parent=51 // pred_check
          %p386 = pneg %p125
        $region54: #{tpu_custom_call.1} parent=51 // pred_check_branch
          %388 = sbr.rel (%p386) target = $region56
        $region55: #{tpu_custom_call.1} parent=51 // pred_region
          %s389 = sand.u32 %s110, 1
          %s390 = scalar_lea.sflag [#allocation5], %s389
          %s391 = sand.u32 %s110, 1
          %s392 = smul.addr %s391, 32
          %s393 = scalar_lea.vmem [#allocation8], %s392
          %394 = dma.done %s390, 512
        $region56: #{tpu_custom_call.1} parent=51 // pred_fallthru
          _
      $region52: #{tpu_custom_call.1} parent=5 // pred_fallthru
        _
    $region6: #{tpu_custom_call.1} parent=1 // loop_footer
      %s21 = sadd.s32 1, %s17
    $region7: #{tpu_custom_call.1} parent=1 // loop_footer_branch
      %16 = sbr.rel target = $region3
    $region8: #{tpu_custom_call.1} parent=1 // loop_exit
      _
    %395 = vsyncpa [#allocation4], 1
    %s396 = scalar_lea.sflag [#allocation4], 1
    %397 = vsyncpa %s396, 1
    %398 = vsyncpa [#allocation7], 1
    %s399 = scalar_lea.sflag [#allocation7], 1
    %400 = vsyncpa %s399, 1
    %401 = vsyncpa [#allocation5], 1
    %s402 = scalar_lea.sflag [#allocation5], 1
    %403 = vsyncpa %s402, 1

</llo_original>
